<compile_context>
chip_gen: v5e
topology: v5e:2x2
jax: 0.10.0
libtpu: 0.0.40
codegen_flags: <defaults>
</compile_context>

<pallas_src>
import numpy as np
import jax
import jax.numpy as jnp
from jax.experimental import pallas as pl
from jax.experimental.pallas import tpu as pltpu


def _round_up(x: int, m: int) -> int:
    return ((x + m - 1) // m) * m


def _vmem_capacity_bytes() -> int:
    """Per-core VMEM capacity; falls back to the smallest generation (v7x, 64 MiB)."""
    try:
        cap = int(pltpu.get_tpu_info().vmem_capacity_bytes)
        if cap > 0:
            return cap
    except Exception:
        pass
    return 64 * 1024 * 1024


def _made_masks(nin: int, hidden_sizes, nout: int):
    """Deterministic MADE-style autoregressive masks for the default
    fully-autoregressive StrNN adjacency A = tril(ones, -1).

    Masks are returned in (out_features, in_features) layout, i.e. the same
    layout as the PyTorch weight / MaskedLinear.mask buffer.  The factorizer
    itself (greedy/zuko/MADE mask search) is host-side NumPy preprocessing,
    not part of the forward compute.
    """
    assert nout % nin == 0
    degrees = [np.arange(1, nin + 1)]
    for h in hidden_sizes:
        degrees.append((np.arange(h) % max(nin - 1, 1)) + 1)
    masks = []
    for l in range(len(hidden_sizes)):
        m_prev, m_cur = degrees[l], degrees[l + 1]
        masks.append((m_cur[:, None] >= m_prev[None, :]).astype(np.float32))
    k = nout // nin
    m_out = np.tile(np.arange(1, nin + 1), k)
    masks.append((m_out[:, None] > degrees[-1][None, :]).astype(np.float32))
    return masks


def _make_strnn_kernel(num_layers: int):
    """Fused masked-MLP kernel: refs = (x, w1, b1, ..., wL, bL, out)."""

    def kernel(*refs):
        x_ref = refs[0]
        o_ref = refs[-1]
        wb = refs[1:-1]
        h = x_ref[...]                       # (TB, in_p), compute dtype (bf16)
        for l in range(num_layers):
            w = wb[2 * l][...]               # (in_p, out_p), pre-masked, resident VMEM
            b = wb[2 * l + 1][...]           # (1, out_p), f32
            # MXU matmul in bf16 with f32 accumulation; bias add stays f32.
            h = jnp.dot(h.astype(w.dtype), w,
                        preferred_element_type=jnp.float32) + b
            if l < num_layers - 1:
                h = jnp.maximum(h, 0.0)      # ReLU in f32
        o_ref[...] = h.astype(o_ref.dtype)   # bf16 HBM write (half the bytes)

    return kernel


class StrNNPallas:
    """Fused StrNN forward with one-time weight preparation."""

    def __init__(self, weights, biases, masks, *,
                 compute_dtype=jnp.bfloat16, out_dtype=jnp.float32,
                 max_batch_tile=1024, use_pallas=None):
        """
        weights: list of (out_f, in_f) float32  (PyTorch nn.Linear layout)
        biases:  list of (out_f,)      float32
        masks:   list of (out_f, in_f) float32  (same layout as weights)
        use_pallas: True/False to force, None for a size-based auto decision.
        """
        self.num_layers = len(weights)
        self.compute_dtype = compute_dtype
        self.out_dtype = out_dtype
        self.max_batch_tile = int(max_batch_tile)
        self.dims = [int(weights[0].shape[1])] + [int(w.shape[0]) for w in weights]
        self.padded = [_round_up(d, 128) for d in self.dims]      # lane-dense feature dims
        self._use_pallas = use_pallas
        self._fwd_cache = {}

        # --- one-time prepare step: pre-mask, transpose, cast, zero-pad -----
        ops = []
        for l in range(self.num_layers):
            w = jnp.asarray(weights[l], jnp.float32)
            b = jnp.asarray(biases[l], jnp.float32)
            m = jnp.asarray(masks[l], jnp.float32)
            wm_t = (m * w).T.astype(compute_dtype)                 # (in_f, out_f)
            in_p, out_p = self.padded[l], self.padded[l + 1]
            wp = jnp.zeros((in_p, out_p), compute_dtype)
            wp = wp.at[:wm_t.shape[0], :wm_t.shape[1]].set(wm_t)  # padding stays zero
            bp = jnp.zeros((1, out_p), jnp.float32)
            bp = bp.at[0, :b.shape[0]].set(b)
            ops += [wp, bp]
        self._wb = ops

        # masked f32 originals kept for the XLA fallback path
        self._masked_w = [jnp.asarray(masks[l], jnp.float32) * jnp.asarray(weights[l], jnp.float32)
                          for l in range(self.num_layers)]
        self._biases_f32 = [jnp.asarray(b, jnp.float32) for b in biases]

        isz = jnp.dtype(compute_dtype).itemsize
        # resident weights are single-buffered (memory_space=VMEM), so count x1
        self._resident_bytes = sum(
            self.padded[l] * self.padded[l + 1] * isz + self.padded[l + 1] * 4
            for l in range(self.num_layers))

    # ----------------------------------------------------------------- utils
    def _auto_use_pallas(self, B: int) -> bool:
        if self._use_pallas is not None:
            return bool(self._use_pallas)
        # tiny configs: 128-padding inflates MXU work and the call is launch/DMA
        # overhead -> let plain XLA handle them.
        return B >= 64 and max(self.dims) >= 64

    def _choose_batch_tile(self, B: int, budget: int):
        """Largest multiple-of-8 batch tile (<= max_batch_tile) whose streamed
        x/out double-buffers fit the VMEM left after resident weights, while
        minimizing batch padding."""
        isz = jnp.dtype(self.compute_dtype).itemsize
        stream_per_row = 2 * (self.padded[0] * isz + self.padded[-1] * isz)  # 2 bufs
        interm_per_row = 4 * max(self.padded)          # f32 intermediate-activation margin
        avail = budget - self._resident_bytes - (2 << 20)
        if avail <= 0:
            return None
        max_tb = min(self.max_batch_tile, avail // (stream_per_row + interm_per_row))
        max_tb = (max_tb // 8) * 8
        if max_tb < 8:
            return None
        if B <= max_tb:
            return _round_up(B, 8)                     # single tile, minimal padding
        # B > max_tb: keep TB in the top half of the feasible range, pick the one
        # that minimizes padding (Bp - B); tie-break on the larger tile.
        best_tb = max_tb
        best_pad = _round_up(B, max_tb) - B
        lo = max(8, ((max_tb // 2) // 8) * 8)
        for tb in range(lo, max_tb + 1, 8):
            pad = _round_up(B, tb) - B
            if pad < best_pad or (pad == best_pad and tb > best_tb):
                best_pad, best_tb = pad, tb
        return best_tb

    # --------------------------------------------------------- forward paths
    def _xla_forward(self, x):
        h = x.astype(self.compute_dtype)
        for l in range(self.num_layers):
            h = jnp.dot(h.astype(self.compute_dtype),
                        self._masked_w[l].T.astype(self.compute_dtype),
                        preferred_element_type=jnp.float32) + self._biases_f32[l]
            if l < self.num_layers - 1:
                h = jnp.maximum(h, 0.0)
        return h.astype(self.out_dtype)

    def _build_pallas_forward(self, B: int, TB: int, Bp: int, vmem_limit: int):
        padded = self.padded
        cdt = self.compute_dtype
        num_layers = self.num_layers
        nin, nout = self.dims[0], self.dims[-1]
        out_dtype = self.out_dtype
        grid = (Bp // TB,)

        in_specs = [pl.BlockSpec((TB, padded[0]), lambda i: (i, 0))]
        for _ in range(num_layers):
            # whole pre-masked weight + bias live in VMEM for the entire call:
            # single copy, single buffer, no per-step re-DMA.
            in_specs.append(pl.BlockSpec(memory_space=pltpu.MemorySpace.VMEM))
            in_specs.append(pl.BlockSpec(memory_space=pltpu.MemorySpace.VMEM))
        out_specs = pl.BlockSpec((TB, padded[-1]), lambda i: (i, 0))

        isz = jnp.dtype(cdt).itemsize
        flops = 2 * Bp * sum(padded[l] * padded[l + 1] for l in range(num_layers))
        bytes_accessed = (Bp * padded[0] * isz + Bp * padded[-1] * isz
                          + self._resident_bytes)
        cost = pl.CostEstimate(flops=int(flops), transcendentals=0,
                               bytes_accessed=int(bytes_accessed))

        call = pl.pallas_call(
            _make_strnn_kernel(num_layers),
            out_shape=jax.ShapeDtypeStruct((Bp, padded[-1]), cdt),
            grid=grid,
            in_specs=in_specs,
            out_specs=out_specs,
            compiler_params=pltpu.CompilerParams(
                dimension_semantics=("parallel",),     # batch tiles split across TCs
                vmem_limit_bytes=int(vmem_limit),
            ),
            cost_estimate=cost,
        )

        def fwd(x, *wb):
            x_p = jnp.zeros((Bp, padded[0]), dtype=cdt)
            x_p = x_p.at[:B, :nin].set(x.astype(cdt))
            y_p = call(x_p, *wb)
            return y_p[:B, :nout].astype(out_dtype)

        return jax.jit(fwd)

    def __call__(self, x):
        B = int(x.shape[0])
        if not self._auto_use_pallas(B):
            return self._xla_forward(x)
        if B not in self._fwd_cache:
            cap = _vmem_capacity_bytes()
            # leave headroom for Mosaic internal scratch: ~85% of physical VMEM
            # (=> ~54 MiB on v7x, ~109 MiB on v5e/v6e).
            budget = min(int(cap * 0.85), cap - (8 << 20))
            tb = self._choose_batch_tile(B, budget)
            if tb is None:
                # resident masked weights do not fit the per-core VMEM budget
                # TODO(synk): weight-streaming Pallas path (HBM K-tiles via
                # emit_pipeline) instead of falling back to plain XLA.
                self._fwd_cache[B] = None
            else:
                Bp = _round_up(B, tb)
                self._fwd_cache[B] = self._build_pallas_forward(B, tb, Bp, budget)
        fwd = self._fwd_cache[B]
        if fwd is None:
            return self._xla_forward(x)
        return fwd(x, *self._wb)


def _ref_forward(x, weights, biases, masks, compute_dtype=jnp.bfloat16):
    """Pure-JAX reference following the same bf16-in / f32-accumulate path."""
    h = x.astype(compute_dtype)
    n = len(weights)
    for l in range(n):
        wm_t = (masks[l] * weights[l]).T.astype(compute_dtype)
        h = jnp.dot(h.astype(compute_dtype), wm_t,
                    preferred_element_type=jnp.float32) + biases[l].astype(jnp.float32)
        if l < n - 1:
            h = jnp.maximum(h, 0.0)
    return h


if __name__ == "__main__":
    # Small StrNN: nin=8, hidden=(32, 32), nout=8, batch=16 (MADE-style masks).
    nin, hidden_sizes, nout, batch = 8, (32, 32), 8, 16
    dims = [nin] + list(hidden_sizes) + [nout]

    key = jax.random.PRNGKey(0)
    keys = jax.random.split(key, 2 * len(dims))

    x = jax.random.normal(keys[0], (batch, nin), dtype=jnp.float32)

    weights, biases = [], []
    for l in range(len(dims) - 1):
        fan_in = dims[l]
        w = jax.random.normal(keys[2 * l + 1], (dims[l + 1], dims[l]),
                              dtype=jnp.float32) / np.sqrt(fan_in)
        b = jax.random.normal(keys[2 * l + 2], (dims[l + 1],),
                              dtype=jnp.float32) * 0.1
        weights.append(w)
        biases.append(b)

    masks = [jnp.asarray(m) for m in _made_masks(nin, hidden_sizes, nout)]

    # use_pallas=True forces the fused kernel even for this toy size
    # (the auto heuristic would route such tiny configs to plain XLA).
    model = StrNNPallas(weights, biases, masks, use_pallas=True)
    y = jax.block_until_ready(model(x))

    y_ref = jax.block_until_ready(_ref_forward(x, weights, biases, masks))

    assert y.shape == (batch, nout), f"bad output shape {y.shape}"
    np.testing.assert_allclose(np.asarray(y, dtype=np.float32),
                               np.asarray(y_ref, dtype=np.float32),
                               rtol=2e-2, atol=2e-2)
    print("KERNEL_OK")
</pallas_src>

<mosaic_0001>
module attributes {stable_mosaic.version = 11 : i64} {
  func.func @kernel(%arg0: i32, %arg1: memref<16x128xbf16, #tpu.memory_space<vmem>>, %arg2: memref<128x128xbf16, #tpu.memory_space<vmem>>, %arg3: memref<1x128xf32, #tpu.memory_space<vmem>>, %arg4: memref<128x128xbf16, #tpu.memory_space<vmem>>, %arg5: memref<1x128xf32, #tpu.memory_space<vmem>>, %arg6: memref<128x128xbf16, #tpu.memory_space<vmem>>, %arg7: memref<1x128xf32, #tpu.memory_space<vmem>>, %arg8: memref<16x128xbf16, #tpu.memory_space<vmem>>) attributes {dimension_semantics = [#tpu.dimension_semantics<parallel>], iteration_bounds = array<i64: 1>, scalar_prefetch = 0 : i64, scratch_operands = 0 : i64, tpu.core_type = #tpu.core_type<tc>, window_params = [{transform_indices = @transform_0, window_bounds = array<i64: 16, 128>}, {pipeline_mode = #tpu.pipeline_mode<synchronous>, transform_indices = @transform_1, window_bounds = array<i64: 128, 128>}, {pipeline_mode = #tpu.pipeline_mode<synchronous>, transform_indices = @transform_2, window_bounds = array<i64: 1, 128>}, {pipeline_mode = #tpu.pipeline_mode<synchronous>, transform_indices = @transform_3, window_bounds = array<i64: 128, 128>}, {pipeline_mode = #tpu.pipeline_mode<synchronous>, transform_indices = @transform_4, window_bounds = array<i64: 1, 128>}, {pipeline_mode = #tpu.pipeline_mode<synchronous>, transform_indices = @transform_5, window_bounds = array<i64: 128, 128>}, {pipeline_mode = #tpu.pipeline_mode<synchronous>, transform_indices = @transform_6, window_bounds = array<i64: 1, 128>}, {transform_indices = @transform_7, window_bounds = array<i64: 16, 128>}]} {
    %c0 = arith.constant 0 : index
    %c0_0 = arith.constant 0 : index
    %0 = vector.load %arg1[%c0, %c0_0] : memref<16x128xbf16, #tpu.memory_space<vmem>>, vector<16x128xbf16>
    %c0_1 = arith.constant 0 : index
    %c0_2 = arith.constant 0 : index
    %1 = vector.load %arg2[%c0_1, %c0_2] : memref<128x128xbf16, #tpu.memory_space<vmem>>, vector<128x128xbf16>
    %c0_3 = arith.constant 0 : index
    %c0_4 = arith.constant 0 : index
    %2 = vector.load %arg3[%c0_3, %c0_4] : memref<1x128xf32, #tpu.memory_space<vmem>>, vector<1x128xf32>
    %cst = arith.constant dense<0.000000e+00> : vector<16x128xf32>
    %3 = tpu.matmul %0, %1, %cst {dimension_numbers = #tpu.dot_dimension_numbers<[1], [0], [0], [1], [0, 0, 1, 1], [], []>} : vector<16x128xbf16>, vector<128x128xbf16>, vector<16x128xf32> -> vector<16x128xf32>
    %4 = vector.broadcast %2 : vector<1x128xf32> to vector<16x128xf32>
    %5 = arith.addf %3, %4 : vector<16x128xf32>
    %cst_5 = arith.constant 0.000000e+00 : f32
    %6 = vector.broadcast %cst_5 : f32 to vector<16x128xf32>
    %7 = arith.maximumf %5, %6 : vector<16x128xf32>
    %c0_6 = arith.constant 0 : index
    %c0_7 = arith.constant 0 : index
    %8 = vector.load %arg4[%c0_6, %c0_7] : memref<128x128xbf16, #tpu.memory_space<vmem>>, vector<128x128xbf16>
    %c0_8 = arith.constant 0 : index
    %c0_9 = arith.constant 0 : index
    %9 = vector.load %arg5[%c0_8, %c0_9] : memref<1x128xf32, #tpu.memory_space<vmem>>, vector<1x128xf32>
    %10 = arith.truncf %7 : vector<16x128xf32> to vector<16x128xbf16>
    %cst_10 = arith.constant dense<0.000000e+00> : vector<16x128xf32>
    %11 = tpu.matmul %10, %8, %cst_10 {dimension_numbers = #tpu.dot_dimension_numbers<[1], [0], [0], [1], [0, 0, 1, 1], [], []>} : vector<16x128xbf16>, vector<128x128xbf16>, vector<16x128xf32> -> vector<16x128xf32>
    %12 = vector.broadcast %9 : vector<1x128xf32> to vector<16x128xf32>
    %13 = arith.addf %11, %12 : vector<16x128xf32>
    %cst_11 = arith.constant 0.000000e+00 : f32
    %14 = vector.broadcast %cst_11 : f32 to vector<16x128xf32>
    %15 = arith.maximumf %13, %14 : vector<16x128xf32>
    %c0_12 = arith.constant 0 : index
    %c0_13 = arith.constant 0 : index
    %16 = vector.load %arg6[%c0_12, %c0_13] : memref<128x128xbf16, #tpu.memory_space<vmem>>, vector<128x128xbf16>
    %c0_14 = arith.constant 0 : index
    %c0_15 = arith.constant 0 : index
    %17 = vector.load %arg7[%c0_14, %c0_15] : memref<1x128xf32, #tpu.memory_space<vmem>>, vector<1x128xf32>
    %18 = arith.truncf %15 : vector<16x128xf32> to vector<16x128xbf16>
    %cst_16 = arith.constant dense<0.000000e+00> : vector<16x128xf32>
    %19 = tpu.matmul %18, %16, %cst_16 {dimension_numbers = #tpu.dot_dimension_numbers<[1], [0], [0], [1], [0, 0, 1, 1], [], []>} : vector<16x128xbf16>, vector<128x128xbf16>, vector<16x128xf32> -> vector<16x128xf32>
    %20 = vector.broadcast %17 : vector<1x128xf32> to vector<16x128xf32>
    %21 = arith.addf %19, %20 : vector<16x128xf32>
    %22 = arith.truncf %21 : vector<16x128xf32> to vector<16x128xbf16>
    %c0_17 = arith.constant 0 : index
    %c0_18 = arith.constant 0 : index
    %23 = vector.load %arg8[%c0_17, %c0_18] : memref<16x128xbf16, #tpu.memory_space<vmem>>, vector<16x128xbf16>
    tpu.vector_store %arg8[%c0_17, %c0_18], %22 {strides = array<i32>} : memref<16x128xbf16, #tpu.memory_space<vmem>>, vector<16x128xbf16>,
    return
  }
  func.func @transform_0(%arg0: i32) -> (i32, i32) {
    %c0_i32 = arith.constant 0 : i32
    %c0_i32_0 = arith.constant 0 : i32
    return %arg0, %c0_i32 : i32, i32
  }
  func.func @transform_1(%arg0: i32) -> (i32, i32) {
    %c0_i32 = arith.constant 0 : i32
    %c0_i32_0 = arith.constant 0 : i32
    %c0_i32_1 = arith.constant 0 : i32
    return %c0_i32, %c0_i32_0 : i32, i32
  }
  func.func @transform_2(%arg0: i32) -> (i32, i32) {
    %c0_i32 = arith.constant 0 : i32
    %c0_i32_0 = arith.constant 0 : i32
    %c0_i32_1 = arith.constant 0 : i32
    return %c0_i32, %c0_i32_0 : i32, i32
  }
  func.func @transform_3(%arg0: i32) -> (i32, i32) {
    %c0_i32 = arith.constant 0 : i32
    %c0_i32_0 = arith.constant 0 : i32
    %c0_i32_1 = arith.constant 0 : i32
    return %c0_i32, %c0_i32_0 : i32, i32
  }
  func.func @transform_4(%arg0: i32) -> (i32, i32) {
    %c0_i32 = arith.constant 0 : i32
    %c0_i32_0 = arith.constant 0 : i32
    %c0_i32_1 = arith.constant 0 : i32
    return %c0_i32, %c0_i32_0 : i32, i32
  }
  func.func @transform_5(%arg0: i32) -> (i32, i32) {
    %c0_i32 = arith.constant 0 : i32
    %c0_i32_0 = arith.constant 0 : i32
    %c0_i32_1 = arith.constant 0 : i32
    return %c0_i32, %c0_i32_0 : i32, i32
  }
  func.func @transform_6(%arg0: i32) -> (i32, i32) {
    %c0_i32 = arith.constant 0 : i32
    %c0_i32_0 = arith.constant 0 : i32
    %c0_i32_1 = arith.constant 0 : i32
    return %c0_i32, %c0_i32_0 : i32, i32
  }
  func.func @transform_7(%arg0: i32) -> (i32, i32) {
    %c0_i32 = arith.constant 0 : i32
    %c0_i32_0 = arith.constant 0 : i32
    return %arg0, %c0_i32 : i32, i32
  }
}

</mosaic_0001>

<llo_original>
// kernel: fwd.1
$region0: #{fwd.1}
  #allocation0 [shape = 'u32[]', space=smem, size = 0x4, offset = 0x4, fixed_abs, tag = 'smem constant byte address 0x4 - core index']
  #allocation1 [shape = 'u32[72,128]{1,0:T(1,128)}', space=vmem, size = 0x9000, scoped, tag = 'internal scratch']
  %s0 = inlined_call_operand.vmem [shape: bf16[16,128], index: 0, kind: input, shape index: {}]
  %s1 = inlined_call_operand.hbm [shape: bf16[128,128], index: 1, kind: input, shape index: {}]
  %s2 = inlined_call_operand.vmem [shape: f32[1,128], index: 2, kind: input, shape index: {}]
  %s3 = inlined_call_operand.hbm [shape: bf16[128,128], index: 3, kind: input, shape index: {}]
  %s4 = inlined_call_operand.vmem [shape: f32[1,128], index: 4, kind: input, shape index: {}]
  %s5 = inlined_call_operand.hbm [shape: bf16[128,128], index: 5, kind: input, shape index: {}]
  %s6 = inlined_call_operand.vmem [shape: f32[1,128], index: 6, kind: input, shape index: {}]
  %s7 = inlined_call_operand.vmem [shape: bf16[16,128], index: 7, kind: output, shape index: {}]
  %s8 = sld [smem:[#allocation0]]
  $region50: #{fwd.1} parent=0
    _
  %s10 = ssub.s32 1, %s8
  %s11 = scalar_select 0, %s10, %s8
  $region1: #{fwd.1} parent=0
    #allocation2 [shape = 'u8[32768]{0}', space=vmem, size = 0x8000, scoped, tag = 'input window, operand 1, single buffered']
    #allocation3 [shape = 's32[1]{0}', space=sflag, size = 0x4, scoped, tag = 'scoped memory for fwd.1']
    #allocation4 [shape = 'u8[32768]{0}', space=vmem, size = 0x8000, scoped, tag = 'input window, operand 3, single buffered']
    #allocation5 [shape = 's32[1]{0}', space=sflag, size = 0x4, scoped, tag = 'scoped memory for fwd.1']
    #allocation6 [shape = 'u8[32768]{0}', space=vmem, size = 0x8000, scoped, tag = 'input window, operand 5, single buffered']
    %12 = vsyncpa [#allocation3], 0
    %13 = vsyncpa [#allocation5], 0
    // Predicated region
    $region2: #{fwd.1} parent=1 // pred_check
      _
    $region3: #{fwd.1} parent=1 // pred_check_branch
      %15 = sbr.rel (0) target = $region5
    $region4: #{fwd.1} parent=1 // pred_region
      _
    $region5: #{fwd.1} parent=1 // pred_fallthru
      _
    // Predicated region
    $region6: #{fwd.1} parent=1 // pred_check
      _
    $region7: #{fwd.1} parent=1 // pred_check_branch
      %17 = sbr.rel (0) target = $region9
    $region8: #{fwd.1} parent=1 // pred_region
      %19 = vsyncadd [#allocation3], 0
      %s20 = sshll.u32 %s1, 4
      %s21 = int_to_ptr.hbm [resolvable:$true] %s20
      %s22 = sshll.u32 [#allocation2], 4
      %s23 = int_to_ptr.vmem [resolvable:$true] %s22
      %28 = dma.hbm_to_vmem [thread:$0]  %s21, 1024, %s23, [#allocation3], 64, 64, 4
    $region9: #{fwd.1} parent=1 // pred_fallthru
      _
    // Predicated region
    $region10: #{fwd.1} parent=1 // pred_check
      _
    $region11: #{fwd.1} parent=1 // pred_check_branch
      %30 = sbr.rel (0) target = $region13
    $region12: #{fwd.1} parent=1 // pred_region
      _
    $region13: #{fwd.1} parent=1 // pred_fallthru
      _
    // Predicated region
    $region14: #{fwd.1} parent=1 // pred_check
      _
    $region15: #{fwd.1} parent=1 // pred_check_branch
      %32 = sbr.rel (0) target = $region17
    $region16: #{fwd.1} parent=1 // pred_region
      %34 = vsyncadd [#allocation5], 0
      %s35 = sshll.u32 %s3, 4
      %s36 = int_to_ptr.hbm [resolvable:$true] %s35
      %s37 = sshll.u32 [#allocation4], 4
      %s38 = int_to_ptr.vmem [resolvable:$true] %s37
      %43 = dma.hbm_to_vmem [thread:$0]  %s36, 1024, %s38, [#allocation5], 64, 64, 4
    $region17: #{fwd.1} parent=1 // pred_fallthru
      _
    // Predicated region
    $region18: #{fwd.1} parent=1 // pred_check
      _
    $region19: #{fwd.1} parent=1 // pred_check_branch
      %45 = sbr.rel (0) target = $region21
    $region20: #{fwd.1} parent=1 // pred_region
      _
    $region21: #{fwd.1} parent=1 // pred_fallthru
      _
    // Predicated region
    $region22: #{fwd.1} parent=1 // pred_check
      _
    $region23: #{fwd.1} parent=1 // pred_check_branch
      %47 = sbr.rel (0) target = $region25
    $region24: #{fwd.1} parent=1 // pred_region
      %49 = vsyncadd [#allocation5], 0
      %s50 = sshll.u32 %s5, 4
      %s51 = int_to_ptr.hbm [resolvable:$true] %s50
      %s52 = sshll.u32 [#allocation6], 4
      %s53 = int_to_ptr.vmem [resolvable:$true] %s52
      %58 = dma.hbm_to_vmem [thread:$0]  %s51, 1024, %s53, [#allocation5], 64, 64, 4
    $region25: #{fwd.1} parent=1 // pred_fallthru
      _
    // Predicated region
    $region26: #{fwd.1} parent=1 // pred_check
      _
    $region27: #{fwd.1} parent=1 // pred_check_branch
      %60 = sbr.rel (0) target = $region29
    $region28: #{fwd.1} parent=1 // pred_region
      _
    $region29: #{fwd.1} parent=1 // pred_fallthru
      _
    // Predicated region
    $region30: #{fwd.1} parent=1 // pred_check
      _
    $region31: #{fwd.1} parent=1 // pred_check_branch
      %62 = sbr.rel (0) target = $region33
    $region32: #{fwd.1} parent=1 // pred_region
      %64 = dma.done [#allocation3], 1024
    $region33: #{fwd.1} parent=1 // pred_fallthru
      _
    // Predicated region
    $region34: #{fwd.1} parent=1 // pred_check
      _
    $region35: #{fwd.1} parent=1 // pred_check_branch
      %66 = sbr.rel (0) target = $region37
    $region36: #{fwd.1} parent=1 // pred_region
      %68 = dma.done [#allocation5], 1024
    $region37: #{fwd.1} parent=1 // pred_fallthru
      _
    // Predicated region
    $region38: #{fwd.1} parent=1 // pred_check
      _
    $region39: #{fwd.1} parent=1 // pred_check_branch
      %70 = sbr.rel (0) target = $region41
    $region40: #{fwd.1} parent=1 // pred_region
      %72 = dma.done [#allocation5], 1024
    $region41: #{fwd.1} parent=1 // pred_fallthru
      _
    %v73 = vld [vmem:[%s0] sm:$0xf]
    %v74 = vld [vmem:[%s0 + $0x4] sm:$0xf]
    %v75 = vld [vmem:[#allocation2] sm:$0xf]
    %v76 = vld [vmem:[#allocation2 + $0x4] sm:$0xf]
    %v77 = vld [vmem:[#allocation2 + $0x8] sm:$0xf]
    %v78 = vld [vmem:[#allocation2 + $0xc] sm:$0xf]
    %v79 = vld [vmem:[#allocation2 + $0x10] sm:$0xf]
    %v80 = vld [vmem:[#allocation2 + $0x14] sm:$0xf]
    %v81 = vld [vmem:[#allocation2 + $0x18] sm:$0xf]
    %v82 = vld [vmem:[#allocation2 + $0x1c] sm:$0xf]
    %v83 = vld [vmem:[#allocation2 + $0x20] sm:$0xf]
    %v84 = vld [vmem:[#allocation2 + $0x24] sm:$0xf]
    %v85 = vld [vmem:[#allocation2 + $0x28] sm:$0xf]
    %v86 = vld [vmem:[#allocation2 + $0x2c] sm:$0xf]
    %v87 = vld [vmem:[#allocation2 + $0x30] sm:$0xf]
    %v88 = vld [vmem:[#allocation2 + $0x34] sm:$0xf]
    %v89 = vld [vmem:[#allocation2 + $0x38] sm:$0xf]
    %v90 = vld [vmem:[#allocation2 + $0x3c] sm:$0xf]
    %v91 = vld [vmem:[%s2] sm:$0x1]
    %v93 = vperm.slane %v91, 0
    %v97 = vunpack.c.l.b16 %v73
    %v98 = vunpack.c.l.b16 %v74
    %v99 = vpack.c.b16 %v98, %v97
    %v117 = vunpack.c.l.b16 %v75
    %v118 = vunpack.c.l.b16 %v76
    %v119 = vunpack.c.l.b16 %v77
    %v120 = vunpack.c.l.b16 %v78
    %v121 = vunpack.c.l.b16 %v79
    %v122 = vunpack.c.l.b16 %v80
    %v123 = vunpack.c.l.b16 %v81
    %v124 = vunpack.c.l.b16 %v82
    %v125 = vunpack.c.l.b16 %v83
    %v126 = vunpack.c.l.b16 %v84
    %v127 = vunpack.c.l.b16 %v85
    %v128 = vunpack.c.l.b16 %v86
    %v129 = vunpack.c.l.b16 %v87
    %v130 = vunpack.c.l.b16 %v88
    %v131 = vunpack.c.l.b16 %v89
    %v132 = vunpack.c.l.b16 %v90
    %v133 = vpack.c.b16 %v118, %v117
    %v134 = vpack.c.b16 %v120, %v119
    %v135 = vpack.c.b16 %v122, %v121
    %v136 = vpack.c.b16 %v124, %v123
    %v137 = vpack.c.b16 %v126, %v125
    %v138 = vpack.c.b16 %v128, %v127
    %v139 = vpack.c.b16 %v130, %v129
    %v140 = vpack.c.b16 %v132, %v131
    %149 = vmatpush.bf16.msra.mxu0 %v140
    %150 = vmatpush.bf16.msra.mxu0 %v139
    %151 = vmatpush.bf16.msra.mxu0 %v138
    %152 = vmatpush.bf16.msra.mxu0 %v137
    %153 = vmatpush.bf16.msra.mxu0 %v136
    %154 = vmatpush.bf16.msra.mxu0 %v135
    %155 = vmatpush.bf16.msra.mxu0 %v134
    %156 = vmatpush.bf16.msra.mxu0 %v133
    %157 = vmatmul.bf16.gmra.mxu0 %v99
    %v158 = vpop.f32.mrf.mxu0
    %v159 = vadd.f32 %v93, %v158
    %v160 = vpop.f32.mrf.mxu0
    %v161 = vadd.f32 %v93, %v160
    %162 = vdwg.mxu0
    %v163 = vmax.f32 %v159, 0.0
    %v164 = vmax.f32 %v161, 0.0
    %v165 = vld [vmem:[#allocation4] sm:$0xf]
    %v166 = vld [vmem:[#allocation4 + $0x4] sm:$0xf]
    %v167 = vld [vmem:[#allocation4 + $0x8] sm:$0xf]
    %v168 = vld [vmem:[#allocation4 + $0xc] sm:$0xf]
    %v169 = vld [vmem:[#allocation4 + $0x10] sm:$0xf]
    %v170 = vld [vmem:[#allocation4 + $0x14] sm:$0xf]
    %v171 = vld [vmem:[#allocation4 + $0x18] sm:$0xf]
    %v172 = vld [vmem:[#allocation4 + $0x1c] sm:$0xf]
    %v173 = vld [vmem:[#allocation4 + $0x20] sm:$0xf]
    %v174 = vld [vmem:[#allocation4 + $0x24] sm:$0xf]
    %v175 = vld [vmem:[#allocation4 + $0x28] sm:$0xf]
    %v176 = vld [vmem:[#allocation4 + $0x2c] sm:$0xf]
    %v177 = vld [vmem:[#allocation4 + $0x30] sm:$0xf]
    %v178 = vld [vmem:[#allocation4 + $0x34] sm:$0xf]
    %v179 = vld [vmem:[#allocation4 + $0x38] sm:$0xf]
    %v180 = vld [vmem:[#allocation4 + $0x3c] sm:$0xf]
    %v181 = vld [vmem:[%s4] sm:$0x1]
    %v182 = vpack.c.bf16 %v164, %v163
    %v184 = vperm.slane %v181, 0
    %v202 = vunpack.c.l.b16 %v165
    %v203 = vunpack.c.l.b16 %v166
    %v204 = vunpack.c.l.b16 %v167
    %v205 = vunpack.c.l.b16 %v168
    %v206 = vunpack.c.l.b16 %v169
    %v207 = vunpack.c.l.b16 %v170
    %v208 = vunpack.c.l.b16 %v171
    %v209 = vunpack.c.l.b16 %v172
    %v210 = vunpack.c.l.b16 %v173
    %v211 = vunpack.c.l.b16 %v174
    %v212 = vunpack.c.l.b16 %v175
    %v213 = vunpack.c.l.b16 %v176
    %v214 = vunpack.c.l.b16 %v177
    %v215 = vunpack.c.l.b16 %v178
    %v216 = vunpack.c.l.b16 %v179
    %v217 = vunpack.c.l.b16 %v180
    %v218 = vpack.c.b16 %v203, %v202
    %v219 = vpack.c.b16 %v205, %v204
    %v220 = vpack.c.b16 %v207, %v206
    %v221 = vpack.c.b16 %v209, %v208
    %v222 = vpack.c.b16 %v211, %v210
    %v223 = vpack.c.b16 %v213, %v212
    %v224 = vpack.c.b16 %v215, %v214
    %v225 = vpack.c.b16 %v217, %v216
    %234 = vmatpush.bf16.msra.mxu0 %v225
    %235 = vmatpush.bf16.msra.mxu0 %v224
    %236 = vmatpush.bf16.msra.mxu0 %v223
    %237 = vmatpush.bf16.msra.mxu0 %v222
    %238 = vmatpush.bf16.msra.mxu0 %v221
    %239 = vmatpush.bf16.msra.mxu0 %v220
    %240 = vmatpush.bf16.msra.mxu0 %v219
    %241 = vmatpush.bf16.msra.mxu0 %v218
    %242 = vmatmul.bf16.gmra.mxu0 %v182
    %v243 = vpop.f32.mrf.mxu0
    %v244 = vadd.f32 %v184, %v243
    %v245 = vpop.f32.mrf.mxu0
    %v246 = vadd.f32 %v184, %v245
    %247 = vdwg.mxu0
    %v248 = vmax.f32 %v244, 0.0
    %v249 = vmax.f32 %v246, 0.0
    %v250 = vld [vmem:[#allocation6] sm:$0xf]
    %v251 = vld [vmem:[#allocation6 + $0x4] sm:$0xf]
    %v252 = vld [vmem:[#allocation6 + $0x8] sm:$0xf]
    %v253 = vld [vmem:[#allocation6 + $0xc] sm:$0xf]
    %v254 = vld [vmem:[#allocation6 + $0x10] sm:$0xf]
    %v255 = vld [vmem:[#allocation6 + $0x14] sm:$0xf]
    %v256 = vld [vmem:[#allocation6 + $0x18] sm:$0xf]
    %v257 = vld [vmem:[#allocation6 + $0x1c] sm:$0xf]
    %v258 = vld [vmem:[#allocation6 + $0x20] sm:$0xf]
    %v259 = vld [vmem:[#allocation6 + $0x24] sm:$0xf]
    %v260 = vld [vmem:[#allocation6 + $0x28] sm:$0xf]
    %v261 = vld [vmem:[#allocation6 + $0x2c] sm:$0xf]
    %v262 = vld [vmem:[#allocation6 + $0x30] sm:$0xf]
    %v263 = vld [vmem:[#allocation6 + $0x34] sm:$0xf]
    %v264 = vld [vmem:[#allocation6 + $0x38] sm:$0xf]
    %v265 = vld [vmem:[#allocation6 + $0x3c] sm:$0xf]
    %v266 = vld [vmem:[%s6] sm:$0x1]
    %v267 = vpack.c.bf16 %v249, %v248
    %v269 = vperm.slane %v266, 0
    %v287 = vunpack.c.l.b16 %v250
    %v288 = vunpack.c.l.b16 %v251
    %v289 = vunpack.c.l.b16 %v252
    %v290 = vunpack.c.l.b16 %v253
    %v291 = vunpack.c.l.b16 %v254
    %v292 = vunpack.c.l.b16 %v255
    %v293 = vunpack.c.l.b16 %v256
    %v294 = vunpack.c.l.b16 %v257
    %v295 = vunpack.c.l.b16 %v258
    %v296 = vunpack.c.l.b16 %v259
    %v297 = vunpack.c.l.b16 %v260
    %v298 = vunpack.c.l.b16 %v261
    %v299 = vunpack.c.l.b16 %v262
    %v300 = vunpack.c.l.b16 %v263
    %v301 = vunpack.c.l.b16 %v264
    %v302 = vunpack.c.l.b16 %v265
    %v303 = vpack.c.b16 %v288, %v287
    %v304 = vpack.c.b16 %v290, %v289
    %v305 = vpack.c.b16 %v292, %v291
    %v306 = vpack.c.b16 %v294, %v293
    %v307 = vpack.c.b16 %v296, %v295
    %v308 = vpack.c.b16 %v298, %v297
    %v309 = vpack.c.b16 %v300, %v299
    %v310 = vpack.c.b16 %v302, %v301
    %319 = vmatpush.bf16.msra.mxu0 %v310
    %320 = vmatpush.bf16.msra.mxu0 %v309
    %321 = vmatpush.bf16.msra.mxu0 %v308
    %322 = vmatpush.bf16.msra.mxu0 %v307
    %323 = vmatpush.bf16.msra.mxu0 %v306
    %324 = vmatpush.bf16.msra.mxu0 %v305
    %325 = vmatpush.bf16.msra.mxu0 %v304
    %326 = vmatpush.bf16.msra.mxu0 %v303
    %327 = vmatmul.bf16.gmra.mxu0 %v267
    %v328 = vpop.f32.mrf.mxu0
    %v329 = vadd.f32 %v269, %v328
    %v330 = vpop.f32.mrf.mxu0
    %v331 = vadd.f32 %v269, %v330
    %332 = vdwg.mxu0
    %v333 = vpack.c.bf16 %v329, %v329
    %v334 = vpack.c.bf16 %v331, %v331
    %335 = vst [vmem:[%s7] sm:$0xf] %v333
    %336 = vst [vmem:[%s7 + $0x4] sm:$0xf] %v334
    // Predicated region
    $region42: #{fwd.1} parent=1 // pred_check
      _
    $region43: #{fwd.1} parent=1 // pred_check_branch
      %338 = sbr.rel (0) target = $region45
    $region44: #{fwd.1} parent=1 // pred_region
      _
    $region45: #{fwd.1} parent=1 // pred_fallthru
      _
    // Predicated region
    $region46: #{fwd.1} parent=1 // pred_check
      _
    $region47: #{fwd.1} parent=1 // pred_check_branch
      %340 = sbr.rel (0) target = $region49
    $region48: #{fwd.1} parent=1 // pred_region
      _
    $region49: #{fwd.1} parent=1 // pred_fallthru
      _
    %341 = vsyncpa [#allocation3], 1
    %342 = vsyncpa [#allocation5], 1

</llo_original>
